<compile_context>
chip_gen: v7x
topology: tpu7x:2x2x1
jax: 0.10.0
libtpu: 0.0.40
codegen_flags: <defaults>
</compile_context>

<pallas_src>
import jax
import jax.numpy as jnp
from jax.experimental import pallas as pl
from jax.experimental.pallas import tpu as pltpu


def tonal_latents_kernel(chroma_ref, lat_ref, out_ref):
    """Normalize chroma per frame and contract over the bin axis on the MXU.

    chroma_ref: [TILE_T, C]   lat_ref: [C, TILE_LD]   out_ref: [TILE_T, TILE_LD]
    out[t, :] = sum_c (chroma[t, c] / sum_c' chroma[t, c']) * lat[c, :]
    """
    ch = chroma_ref[...]                                    # [TILE_T, C]
    denom = jnp.sum(ch, axis=1, keepdims=True)              # [TILE_T, 1]
    # NOTE: frames summing to zero give inf/NaN, same hazard as the PyTorch
    # original (documented assumption: chroma frames are non-degenerate).
    ch_n = ch * pl.reciprocal(denom, approx=False)          # exact, keeps 1e-5 tol
    out_ref[...] = jnp.dot(
        ch_n, lat_ref[...], preferred_element_type=jnp.float32
    ).astype(out_ref.dtype)


def _round_up(x, m):
    return -(-x // m) * m


def _vmem_capacity_bytes():
    """Physical VMEM query with a generation-correct fallback."""
    try:
        info = pltpu.get_tpu_info()
        for attr in ("vmem_capacity_bytes", "vmem_bytes", "vmem_size_bytes"):
            v = getattr(info, attr, None)
            if v:
                return int(v)
    except Exception:
        pass
    try:
        kind = jax.devices()[0].device_kind.lower()
        if "v7" in kind or "7x" in kind:
            return 64 << 20                  # v7x: 64 MiB per TensorCore
        if "v5" in kind or "v6" in kind:
            return 128 << 20                 # v5e / v6e: 128 MiB
    except Exception:
        pass
    return 64 << 20                          # conservative default


def _select_tiles(T, C, LD_pad, out_itemsize):
    """Pick (tile_t, tile_ld, vmem_limit) from a padded-layout working-set model."""
    vmem_cap = _vmem_capacity_bytes()
    budget = int(vmem_cap * 0.60)            # headroom for compiler scratch / regs

    # LD tile: largest multiple of 128 (<= 4096) that evenly divides LD_pad,
    # so every output block is fully lane-dense (unmasked stores).
    tile_ld = 128
    for cand in range(min(LD_pad, 4096), 127, -128):
        if LD_pad % cand == 0:
            tile_ld = cand
            break

    c_lanes = _round_up(C, 128)              # chroma block lane padding (C=12 -> 128)
    c_sub = _round_up(C, 8)                  # latent block sublane padding (12 -> 16)

    def need_bytes(tt, tl):
        out_sub = _round_up(tt, 16) if out_itemsize == 2 else tt
        chroma = 2 * tt * c_lanes * 4                    # double-buffered
        latent = 2 * c_sub * tl * 4                      # double-buffered
        out = 2 * out_sub * tl * out_itemsize            # double-buffered
        return chroma + latent + out

    t_pad = _round_up(T, 8)
    tile_t = 8
    for cand in (1024, 512, 256, 128, 64, 32, 16, 8):
        if need_bytes(cand, tile_ld) <= budget:
            tile_t = cand
            break
    tile_t = max(8, min(tile_t, t_pad))

    # Guarantee >= 2 grid tiles (when possible) so v7x megacore can shard the
    # "parallel" axes across both TensorCores; neutral on single-TC v5e/v6e.
    nt = -(-T // tile_t)
    nld = LD_pad // tile_ld
    if nt * nld < 2 and t_pad >= 16:
        tile_t = max(8, _round_up((t_pad + 1) // 2, 8))

    need = need_bytes(tile_t, tile_ld)
    vmem_limit = int(min(max(need + (16 << 20), 32 << 20), int(vmem_cap * 0.92)))
    return tile_t, tile_ld, vmem_limit


def compute_tonal_latents(latent_selection, chroma_or_tonnetz, out_dtype=jnp.float32):
    """Precompute the per-frame latent buffer (the module's __init__ hot path).

    out_dtype=jnp.bfloat16 halves the dominant HBM writeback (recommended on
    v5e/v6e when downstream tolerates it); default float32 matches PyTorch.
    """
    C, B1, L, D = latent_selection.shape
    C2, T = chroma_or_tonnetz.shape
    assert C == C2 and B1 == 1
    LD = L * D
    LD_pad = _round_up(LD, 128)

    lat_flat = latent_selection.reshape(C, LD).astype(jnp.float32)
    if LD_pad != LD:
        # Lane-pad so the kernel's stores are unmasked; padded cols sliced off
        # afterwards.  No-op for the common LD = 18*512 = 9216 case.
        lat_flat = jnp.pad(lat_flat, ((0, 0), (0, LD_pad - LD)))
    chroma_t = chroma_or_tonnetz.astype(jnp.float32).T      # [T, C], tiny transpose

    out_itemsize = jnp.dtype(out_dtype).itemsize
    tile_t, tile_ld, vmem_limit = _select_tiles(T, C, LD_pad, out_itemsize)
    grid = (pl.cdiv(T, tile_t), LD_pad // tile_ld)

    cost = pl.CostEstimate(
        flops=2 * C * T * LD_pad,
        transcendentals=0,
        bytes_accessed=(4 * T * C                      # chroma, read once
                        + 4 * grid[0] * C * LD_pad     # latent, once per frame tile
                        + out_itemsize * T * LD_pad),  # output writeback (binding)
    )

    out = pl.pallas_call(
        tonal_latents_kernel,
        out_shape=jax.ShapeDtypeStruct((T, LD_pad), out_dtype),
        grid=grid,
        in_specs=[
            pl.BlockSpec((tile_t, C), lambda i, j: (i, 0)),      # chroma frame tile
            pl.BlockSpec((C, tile_ld), lambda i, j: (0, j)),     # latent column tile
        ],
        out_specs=pl.BlockSpec((tile_t, tile_ld), lambda i, j: (i, j)),
        compiler_params=pltpu.CompilerParams(
            dimension_semantics=("parallel", "parallel"),        # megacore shards tiles
            vmem_limit_bytes=vmem_limit,
        ),
        cost_estimate=cost,
    )(chroma_t, lat_flat)

    if LD_pad != LD:
        out = out[:, :LD]
    return out.reshape(T, 1, L, D)


@jax.jit
def _fetch_frame(latents, index):
    # latents[[index]] keeps the leading frame dim of size 1.
    # NOTE: one tiny dispatch per frame; batch-fetch or consumer-side slicing
    # avoids per-call overhead if this ever shows up end-to-end.
    return jax.lax.dynamic_slice_in_dim(latents, index, 1, axis=0)


class TonalLatents:
    """JAX/Pallas port of the PyTorch module; the frame counter stays Python-side."""

    def __init__(self, latent_selection, chroma_or_tonnetz, out_dtype=jnp.float32):
        self.latents = compute_tonal_latents(
            latent_selection, chroma_or_tonnetz, out_dtype=out_dtype
        )
        self.index = 0  # TODO(synk): Python-side counter; no in-kernel mutable state needed.

    def __call__(self):
        frame = _fetch_frame(self.latents, self.index)
        self.index += 1
        return frame


if __name__ == "__main__":
    key = jax.random.PRNGKey(0)
    k1, k2 = jax.random.split(key)

    C, T, L, D = 12, 8, 6, 32          # bins, frames, layers, latent dim (small)
    latent_selection = jax.random.normal(k1, (C, 1, L, D), dtype=jnp.float32)
    chroma = jax.random.uniform(k2, (C, T), dtype=jnp.float32,
                                minval=0.1, maxval=1.0)

    module = TonalLatents(latent_selection, chroma)
    out0 = module()                    # frame 0 -> [1, 1, L, D]
    out1 = module()                    # frame 1 -> [1, 1, L, D]
    jax.block_until_ready(out0)
    jax.block_until_ready(out1)

    # Pure-JAX reference mirroring the exact PyTorch broadcast.
    ch_n = chroma / chroma.sum(0)
    ref = (ch_n[..., None, None, None] * latent_selection[:, None]).sum(0)  # [T,1,L,D]

    assert out0.shape == (1, 1, L, D)
    assert out1.shape == (1, 1, L, D)
    assert jnp.allclose(out0[0], ref[0], atol=1e-5, rtol=1e-5)
    assert jnp.allclose(out1[0], ref[1], atol=1e-5, rtol=1e-5)

    print("KERNEL_OK")
</pallas_src>

<mosaic_0001>
module attributes {stable_mosaic.version = 11 : i64} {
  func.func @tonal_latents_kernel(%arg0: i32, %arg1: i32, %arg2: memref<8x12xf32, #tpu.memory_space<vmem>>, %arg3: memref<12x256xf32, #tpu.memory_space<vmem>>, %arg4: memref<8x256xf32, #tpu.memory_space<vmem>>) attributes {dimension_semantics = [#tpu.dimension_semantics<parallel>, #tpu.dimension_semantics<parallel>], iteration_bounds = array<i64: 1, 1>, scalar_prefetch = 0 : i64, scratch_operands = 0 : i64, tpu.core_type = #tpu.core_type<tc>, window_params = [{transform_indices = @transform_0, window_bounds = array<i64: 8, 12>}, {transform_indices = @transform_1, window_bounds = array<i64: 12, 256>}, {transform_indices = @transform_2, window_bounds = array<i64: 8, 256>}]} {
    %c0 = arith.constant 0 : index
    %c0_0 = arith.constant 0 : index
    %0 = vector.load %arg2[%c0, %c0_0] : memref<8x12xf32, #tpu.memory_space<vmem>>, vector<8x12xf32>
    %cst = arith.constant dense<0.000000e+00> : vector<8xf32>
    %1 = vector.multi_reduction <add>, %0, %cst [1] : vector<8x12xf32> to vector<8xf32>
    %2 = vector.shape_cast %1 : vector<8xf32> to vector<8x1xf32>
    %3 = tpu.reciprocal %2 : vector<8x1xf32> -> vector<8x1xf32>
    %4 = vector.broadcast %3 : vector<8x1xf32> to vector<8x12xf32>
    %5 = arith.mulf %0, %4 : vector<8x12xf32>
    %c0_1 = arith.constant 0 : index
    %c0_2 = arith.constant 0 : index
    %6 = vector.load %arg3[%c0_1, %c0_2] : memref<12x256xf32, #tpu.memory_space<vmem>>, vector<12x256xf32>
    %cst_3 = arith.constant dense<0.000000e+00> : vector<8x256xf32>
    %7 = tpu.matmul %5, %6, %cst_3 {dimension_numbers = #tpu.dot_dimension_numbers<[1], [0], [0], [1], [0, 0, 1, 1], [], []>} : vector<8x12xf32>, vector<12x256xf32>, vector<8x256xf32> -> vector<8x256xf32>
    %c0_4 = arith.constant 0 : index
    %c0_5 = arith.constant 0 : index
    %8 = vector.load %arg4[%c0_4, %c0_5] : memref<8x256xf32, #tpu.memory_space<vmem>>, vector<8x256xf32>
    tpu.vector_store %arg4[%c0_4, %c0_5], %7 {strides = array<i32>} : memref<8x256xf32, #tpu.memory_space<vmem>>, vector<8x256xf32>,
    return
  }
  func.func @transform_0(%arg0: i32, %arg1: i32) -> (i32, i32) {
    %c0_i32 = arith.constant 0 : i32
    %c0_i32_0 = arith.constant 0 : i32
    return %arg0, %c0_i32 : i32, i32
  }
  func.func @transform_1(%arg0: i32, %arg1: i32) -> (i32, i32) {
    %c0_i32 = arith.constant 0 : i32
    %c0_i32_0 = arith.constant 0 : i32
    return %c0_i32, %arg1 : i32, i32
  }
  func.func @transform_2(%arg0: i32, %arg1: i32) -> (i32, i32) {
    %c0_i32 = arith.constant 0 : i32
    return %arg0, %arg1 : i32, i32
  }
}

</mosaic_0001>

<llo_original>
// kernel: tpu_custom_call.1
$region0: #{tpu_custom_call.1}
  #allocation0 [shape = 'u32[]', space=smem, size = 0x4, offset = 0x4, fixed_abs, tag = 'smem constant byte address 0x4 - core index']
  #allocation1 [shape = 'u32[144,128]{1,0:T(1,128)}', space=vmem, size = 0x12000, scoped, tag = 'internal scratch']
  %s0 = inlined_call_operand.hbm [shape: f32[8,12], index: 0, kind: input, shape index: {}]
  %s1 = inlined_call_operand.hbm [shape: f32[12,256], index: 1, kind: input, shape index: {}]
  %s2 = inlined_call_operand.hbm [shape: f32[8,256], index: 2, kind: output, shape index: {}]
  %s3 = sld [smem:[#allocation0]]
  $region26: #{tpu_custom_call.1} parent=0
    _
  %s5 = ssub.s32 1, %s3
  %s6 = scalar_select 0, %s5, %s3
  $region1: #{tpu_custom_call.1} parent=0
    #allocation2 [shape = 'u8[4096]{0}', space=vmem, size = 0x1000, scoped, tag = 'input window, operand 0, single buffered']
    #allocation3 [shape = 's32[1]{0}', space=sflag, size = 0x4, scoped, tag = 'scoped memory for tpu_custom_call.1']
    #allocation4 [shape = 's32[1]{0}', space=sflag, size = 0x4, scoped, tag = 'scoped memory for tpu_custom_call.1']
    #allocation5 [shape = 'u8[16384]{0}', space=vmem, size = 0x4000, scoped, tag = 'input window, operand 1, single buffered']
    #allocation6 [shape = 's32[1]{0}', space=sflag, size = 0x4, scoped, tag = 'scoped memory for tpu_custom_call.1']
    #allocation7 [shape = 'u8[8192]{0}', space=vmem, size = 0x2000, scoped, tag = 'output window, operand 0, single buffered']
    %7 = vsyncpa [#allocation3], 0
    %8 = vsyncpa [#allocation6], 0
    %9 = vsyncpa [#allocation4], 0
    // Predicated region
    $region2: #{tpu_custom_call.1} parent=1 // pred_check
      _
    $region3: #{tpu_custom_call.1} parent=1 // pred_check_branch
      %11 = sbr.rel (0) target = $region5
    $region4: #{tpu_custom_call.1} parent=1 // pred_region
      %s13 = ssub.s32 128, 128
      %14 = vsyncadd [#allocation3], %s13
      %s16 = sshll.u32 [#allocation2], 4
      %s17 = int_to_ptr.vmem [resolvable:$true] %s16
      %19 = dma.hbm_to_vmem [thread:$0]  %s0, 128, %s17, [#allocation3]
    $region5: #{tpu_custom_call.1} parent=1 // pred_fallthru
      _
    // Predicated region
    $region6: #{tpu_custom_call.1} parent=1 // pred_check
      _
    $region7: #{tpu_custom_call.1} parent=1 // pred_check_branch
      %21 = sbr.rel (0) target = $region9
    $region8: #{tpu_custom_call.1} parent=1 // pred_region
      %s23 = ssub.s32 512, 512
      %24 = vsyncadd [#allocation6], %s23
      %s25 = sshll.u32 [#allocation5], 4
      %s26 = int_to_ptr.vmem [resolvable:$true] %s25
      %31 = dma.hbm_to_vmem [thread:$0]  %s1, 512, %s26, [#allocation6], 256, 256, 16
    $region9: #{tpu_custom_call.1} parent=1 // pred_fallthru
      _
    // Predicated region
    $region10: #{tpu_custom_call.1} parent=1 // pred_check
      _
    $region11: #{tpu_custom_call.1} parent=1 // pred_check_branch
      %33 = sbr.rel (0) target = $region13
    $region12: #{tpu_custom_call.1} parent=1 // pred_region
      %34 = dma.done [#allocation3], 128
    $region13: #{tpu_custom_call.1} parent=1 // pred_fallthru
      _
    // Predicated region
    $region14: #{tpu_custom_call.1} parent=1 // pred_check
      _
    $region15: #{tpu_custom_call.1} parent=1 // pred_check_branch
      %36 = sbr.rel (0) target = $region17
    $region16: #{tpu_custom_call.1} parent=1 // pred_region
      %37 = dma.done [#allocation6], 512
    $region17: #{tpu_custom_call.1} parent=1 // pred_fallthru
      _
    %v38 = vld [vmem:[#allocation2] sm:$0xff]
    %vm39 = vcmask 97280
    %v40 = vsel %vm39, %v38, 0.0
    %41 = vadd.xlane.f32.xlu0 %v40
    %v42 = vpop.xlane.xlu0 %41
    %v43 = vrcp.pop %v42
    %v44 = vmul.f32 %v38, %v43
    %v45 = vld [vmem:[#allocation5] sm:$0xff]
    %v46 = vld [vmem:[#allocation5 + $0x8] sm:$0xff]
    %v47 = vld [vmem:[#allocation5 + $0x10] sm:$0xf]
    %v48 = vld [vmem:[#allocation5 + $0x18] sm:$0xf]
    %v50 = vsel %vm39, %v44, 0
    %vm52 = vcmask 1043456
    %v54 = vsel %vm52, %v47, 0
    %v57 = vsel %vm52, %v48, 0
    %59 = vmatprep.subr.mxu0 %v46
    %60 = vmatpush1.msra.mxu0 %v45
    %61 = vmatprep.subr.mxu0 %v57
    %62 = vmatpush1.msra.mxu0 %v54
    %63 = vmatprep.subr.mxu0 0.0
    %64 = vmatpush1.msra.mxu0 0.0
    %65 = vmatprep.subr.mxu0 0.0
    %66 = vmatpush1.msra.mxu0 0.0
    %67 = vmatprep.subr.mxu0 0.0
    %68 = vmatpush1.msra.mxu0 0.0
    %69 = vmatprep.subr.mxu0 0.0
    %70 = vmatpush1.msra.mxu0 0.0
    %71 = vmatprep.subr.mxu0 0.0
    %72 = vmatpush1.msra.mxu0 0.0
    %73 = vmatprep.subr.mxu0 0.0
    %74 = vmatpush1.msra.mxu0 0.0
    %75 = vmatprep.subr.mxu0 0.0
    %76 = vmatpush1.msra.mxu0 0.0
    %77 = vmatprep.subr.mxu0 0.0
    %78 = vmatpush1.msra.mxu0 0.0
    %79 = vmatprep.subr.mxu0 0.0
    %80 = vmatpush1.msra.mxu0 0.0
    %81 = vmatprep.subr.mxu0 0.0
    %82 = vmatpush1.msra.mxu0 0.0
    %83 = vmatprep.subr.mxu0 0.0
    %84 = vmatpush1.msra.mxu0 0.0
    %85 = vmatprep.subr.mxu0 0.0
    %86 = vmatpush1.msra.mxu0 0.0
    %87 = vmatprep.subr.mxu0 0.0
    %88 = vmatpush1.msra.mxu0 0.0
    %89 = vmatprep.subr.mxu0 0.0
    %90 = vmatpush1.msra.mxu0 0.0
    %91 = vmatprep.subr.mxu0 0.0
    %92 = vmatpush1.msra.mxu0 0.0
    %93 = vmatprep.subr.mxu0 0.0
    %94 = vmatpush1.msra.mxu0 0.0
    %95 = vmatprep.subr.mxu0 0.0
    %96 = vmatpush1.msra.mxu0 0.0
    %97 = vmatprep.subr.mxu0 0.0
    %98 = vmatpush1.msra.mxu0 0.0
    %99 = vmatprep.subr.mxu0 0.0
    %100 = vmatpush1.msra.mxu0 0.0
    %101 = vmatprep.subr.mxu0 0.0
    %102 = vmatpush1.msra.mxu0 0.0
    %103 = vmatprep.subr.mxu0 0.0
    %104 = vmatpush1.msra.mxu0 0.0
    %105 = vmatprep.subr.mxu0 0.0
    %106 = vmatpush1.msra.mxu0 0.0
    %107 = vmatprep.subr.mxu0 0.0
    %108 = vmatpush1.msra.mxu0 0.0
    %109 = vmatprep.subr.mxu0 0.0
    %110 = vmatpush1.msra.mxu0 0.0
    %111 = vmatprep.subr.mxu0 0.0
    %112 = vmatpush1.msra.mxu0 0.0
    %113 = vmatprep.subr.mxu0 0.0
    %114 = vmatpush1.msra.mxu0 0.0
    %115 = vmatprep.subr.mxu0 0.0
    %116 = vmatpush1.msra.mxu0 0.0
    %117 = vmatprep.subr.mxu0 0.0
    %118 = vmatpush1.msra.mxu0 0.0
    %119 = vmatprep.subr.mxu0 0.0
    %120 = vmatpush1.msra.mxu0 0.0
    %121 = vmatprep.subr.mxu0 0.0
    %122 = vmatpush1.msra.mxu0 0.0
    %123 = vmatprep.mubr.f32.mxu0 0.0
    %124 = vmatmul.mubr.f32.gmra.mrb[0].mxu0 %v50
    %v125 = vpop.f32.mrb[0].mxu0
    %v126 = vadd.f32 0.0, %v125
    %v127 = vpop.f32.mrb[0].mxu0
    %v128 = vadd.f32 0.0, %v127
    %129 = vdwg.mxu0
    %130 = vst [vmem:[#allocation7] sm:$0xff] %v126
    %131 = vst [vmem:[#allocation7 + $0x8] sm:$0xff] %v128
    // Predicated region
    $region18: #{tpu_custom_call.1} parent=1 // pred_check
      _
    $region19: #{tpu_custom_call.1} parent=1 // pred_check_branch
      %133 = sbr.rel (0) target = $region21
    $region20: #{tpu_custom_call.1} parent=1 // pred_region
      %s135 = ssub.s32 256, 256
      %136 = vsyncadd [#allocation4], %s135
      %s138 = sshll.u32 [#allocation7], 4
      %s139 = int_to_ptr.vmem [resolvable:$true] %s138
      %141 = dma.vmem_to_hbm [thread:$0]  %s139, 256, %s2, [#allocation4]
    $region21: #{tpu_custom_call.1} parent=1 // pred_fallthru
      _
    // Predicated region
    $region22: #{tpu_custom_call.1} parent=1 // pred_check
      _
    $region23: #{tpu_custom_call.1} parent=1 // pred_check_branch
      %143 = sbr.rel (0) target = $region25
    $region24: #{tpu_custom_call.1} parent=1 // pred_region
      %144 = dma.done [#allocation4], 256
    $region25: #{tpu_custom_call.1} parent=1 // pred_fallthru
      _
    %145 = vsyncpa [#allocation3], 1
    %146 = vsyncpa [#allocation6], 1
    %147 = vsyncpa [#allocation4], 1

</llo_original>
